<compile_context>
chip_gen: v6e
topology: v6e:2x2x1
jax: 0.10.0
libtpu: 0.0.40
codegen_flags: <defaults>
</compile_context>

<pallas_src>
from typing import Tuple

import jax
import jax.numpy as jnp
from jax import lax
from jax.experimental import pallas as pl
from jax.experimental.pallas import tpu as pltpu


def _round_up(v: int, m: int) -> int:
    return ((v + m - 1) // m) * m


# ----------------------------------------------------------------------------
# Pallas kernel 1: per-node projection
#   AB = x @ W_node + one_hot(nt) @ T_node + bias_row
# ----------------------------------------------------------------------------
def _node_proj_kernel(x_ref, nt_ref, w_ref, t_ref, b_ref, o_ref):
    tile_n = x_ref.shape[0]
    num_types = t_ref.shape[0]
    # In-kernel one-hot via iota compare (replaces the one-hot concat columns).
    type_iota = lax.broadcasted_iota(jnp.int32, (tile_n, num_types), 1)
    oh = (nt_ref[...] == type_iota).astype(x_ref.dtype)            # [tile_n, T]
    acc = jnp.dot(x_ref[...], w_ref[...], preferred_element_type=jnp.float32)
    acc = acc + jnp.dot(oh, t_ref[...], preferred_element_type=jnp.float32)
    acc = acc + b_ref[...]
    o_ref[...] = acc.astype(o_ref.dtype)


def node_projection(x: jax.Array, node_types: jax.Array, w_node: jax.Array,
                    t_node: jax.Array, bias_row: jax.Array,
                    *, max_tile_n: int = 1024) -> jax.Array:
    """Returns AB [N, 2*d_out]: cols [:d_out] = src contribution (+bias),
    cols [d_out:] = dst contribution."""
    N, in_ch = x.shape
    two_dout = w_node.shape[1]
    num_types = t_node.shape[0]

    tile_n = min(max_tile_n, _round_up(N, 8))
    n_pad = _round_up(N, tile_n)
    if n_pad != N:
        x = jnp.pad(x, ((0, n_pad - N), (0, 0)))
        node_types = jnp.pad(node_types, (0, n_pad - N))
    nt2d = node_types.reshape(n_pad, 1).astype(jnp.int32)

    out = pl.pallas_call(
        _node_proj_kernel,
        out_shape=jax.ShapeDtypeStruct((n_pad, two_dout), x.dtype),
        grid_spec=pltpu.PrefetchScalarGridSpec(
            num_scalar_prefetch=0,
            grid=(n_pad // tile_n,),
            in_specs=[
                pl.BlockSpec((tile_n, in_ch), lambda i: (i, 0)),        # x tile
                pl.BlockSpec((tile_n, 1), lambda i: (i, 0)),            # node types
                pl.BlockSpec((in_ch, two_dout), lambda i: (0, 0)),      # W_node (full)
                pl.BlockSpec((num_types, two_dout), lambda i: (0, 0)),  # type table (full)
                pl.BlockSpec((1, two_dout), lambda i: (0, 0)),          # bias row
            ],
            out_specs=pl.BlockSpec((tile_n, two_dout), lambda i: (i, 0)),
        ),
        compiler_params=pltpu.CompilerParams(
            dimension_semantics=("parallel",)),
    )(x, nt2d, w_node, t_node, bias_row)
    return out[:N]


# ----------------------------------------------------------------------------
# Pallas kernel 2: fused add + tanh over edges, lane-dense [rows, 128] layout
# ----------------------------------------------------------------------------
def _add_tanh_kernel(a_ref, b_ref, o_ref):
    o_ref[...] = jnp.tanh(a_ref[...] + b_ref[...]).astype(o_ref.dtype)


def edge_add_tanh(a_e: jax.Array, b_e: jax.Array,
                  *, max_tile_rows: int = 2048) -> jax.Array:
    """tanh(a_e + b_e), both [E, d_out], computed on a lane-dense flat layout."""
    E, d_out = a_e.shape
    total = E * d_out
    rows = pl.cdiv(total, 128)
    tile_rows = min(max_tile_rows, _round_up(rows, 8))
    rows_pad = _round_up(rows, tile_rows)
    flat_pad = rows_pad * 128

    a_flat = jnp.pad(a_e.reshape(-1), (0, flat_pad - total)).reshape(rows_pad, 128)
    b_flat = jnp.pad(b_e.reshape(-1), (0, flat_pad - total)).reshape(rows_pad, 128)

    out = pl.pallas_call(
        _add_tanh_kernel,
        out_shape=jax.ShapeDtypeStruct((rows_pad, 128), a_e.dtype),
        grid_spec=pltpu.PrefetchScalarGridSpec(
            num_scalar_prefetch=0,
            grid=(rows_pad // tile_rows,),
            in_specs=[
                pl.BlockSpec((tile_rows, 128), lambda i: (i, 0)),
                pl.BlockSpec((tile_rows, 128), lambda i: (i, 0)),
            ],
            out_specs=pl.BlockSpec((tile_rows, 128), lambda i: (i, 0)),
        ),
        compiler_params=pltpu.CompilerParams(
            dimension_semantics=("parallel",)),
    )(a_flat, b_flat)
    return out.reshape(-1)[:total].reshape(E, d_out)


# ----------------------------------------------------------------------------
# Wrapper reproducing NodeTypeConcatSheafLearner.forward (sheaf_act='tanh')
# ----------------------------------------------------------------------------
def node_type_concat_sheaf_learner_forward(
    x: jax.Array,                 # [N, in_channels] float32
    edge_index: jax.Array,        # [2, E] int32
    node_types: jax.Array,        # [N]   int32
    w: jax.Array,                 # [2*in_channels + 2*num_node_types, prod(out_shape)]
    b: jax.Array,                 # [prod(out_shape)]
    out_shape: Tuple[int, ...],
    num_node_types: int = 4,
) -> jax.Array:
    N, in_ch = x.shape
    d_out = w.shape[1]
    assert w.shape[0] == 2 * in_ch + 2 * num_node_types

    # Split the Linear weight according to the concat layout
    # [x_src | x_dst | one_hot_src | one_hot_dst].
    w_src = w[:in_ch]
    w_dst = w[in_ch:2 * in_ch]
    t_src = w[2 * in_ch:2 * in_ch + num_node_types]
    t_dst = w[2 * in_ch + num_node_types:]

    w_node = jnp.concatenate([w_src, w_dst], axis=1)          # [in_ch, 2*d_out]
    t_node = jnp.concatenate([t_src, t_dst], axis=1)          # [T, 2*d_out]
    # Bias folded into the src-side half once per node.
    bias_row = jnp.concatenate([b, jnp.zeros_like(b)]).reshape(1, 2 * d_out)

    # Stage 1 (Pallas): per-node projections, computed once over N nodes.
    ab = node_projection(x, node_types, w_node, t_node, bias_row)  # [N, 2*d_out]

    # Stage 2 (XLA glue): dynamic row gather of the tiny [N, d_out] projections.
    # TODO(synk): fuse this row gather into the edge kernel once a robust
    #             Mosaic dynamic row-gather path is available.
    src, dst = edge_index[0], edge_index[1]
    a_e = jnp.take(ab[:, :d_out], src, axis=0)                 # [E, d_out]
    b_e = jnp.take(ab[:, d_out:], dst, axis=0)                 # [E, d_out]

    # Stage 3 (Pallas): fused add + tanh, lane-dense output.
    maps = edge_add_tanh(a_e, b_e)                             # [E, d_out]

    if len(out_shape) == 2:
        return maps.reshape(-1, out_shape[0], out_shape[1])
    return maps.reshape(-1, out_shape[0])


# ----------------------------------------------------------------------------
# Example / self-test
# ----------------------------------------------------------------------------
if __name__ == "__main__":
    key = jax.random.PRNGKey(0)
    k_x, k_nt, k_src, k_dst, k_w, k_b = jax.random.split(key, 6)

    # Small, module-consistent shapes (E and N deliberately NOT multiples of 8
    # to exercise the cdiv/padding path).
    N = 50                # number of nodes
    E = 200               # number of edges
    in_channels = 16
    num_node_types = 4
    out_shape = (2, 2)    # sheaf map is d x d with d = 2

    d_in = 2 * in_channels + 2 * num_node_types   # 40
    d_out = int(out_shape[0] * out_shape[1])      # 4

    x = jax.random.normal(k_x, (N, in_channels), dtype=jnp.float32)
    node_types = jax.random.randint(k_nt, (N,), 0, num_node_types, dtype=jnp.int32)
    src = jax.random.randint(k_src, (E,), 0, N, dtype=jnp.int32)
    dst = jax.random.randint(k_dst, (E,), 0, N, dtype=jnp.int32)
    edge_index = jnp.stack([src, dst], axis=0)

    # Single-layer MLP == one Linear(d_in -> d_out); hidden_channels unused.
    w = jax.random.normal(k_w, (d_in, d_out), dtype=jnp.float32) * 0.1
    b = jax.random.normal(k_b, (d_out,), dtype=jnp.float32) * 0.01

    maps = node_type_concat_sheaf_learner_forward(
        x, edge_index, node_types, w, b, out_shape, num_node_types)
    maps = jax.block_until_ready(maps)

    # Reference check against plain JAX (original concat formulation).
    nt_oh = jax.nn.one_hot(node_types, num_node_types, dtype=x.dtype)
    x_cat_ref = jnp.concatenate([x[src], x[dst], nt_oh[src], nt_oh[dst]], axis=1)
    ref = jnp.tanh(x_cat_ref @ w + b).reshape(-1, *out_shape)

    assert maps.shape == (E, out_shape[0], out_shape[1])
    assert jnp.allclose(maps, ref, atol=1e-5, rtol=1e-5)

    print("KERNEL_OK")
</pallas_src>

<mosaic_0001>
module attributes {stable_mosaic.version = 11 : i64} {
  func.func @_node_proj_kernel(%arg0: i32, %arg1: memref<56x16xf32, #tpu.memory_space<vmem>>, %arg2: memref<56x1xi32, #tpu.memory_space<vmem>>, %arg3: memref<16x8xf32, #tpu.memory_space<vmem>>, %arg4: memref<4x8xf32, #tpu.memory_space<vmem>>, %arg5: memref<1x8xf32, #tpu.memory_space<vmem>>, %arg6: memref<56x8xf32, #tpu.memory_space<vmem>>) attributes {dimension_semantics = [#tpu.dimension_semantics<parallel>], iteration_bounds = array<i64: 1>, scalar_prefetch = 0 : i64, scratch_operands = 0 : i64, tpu.core_type = #tpu.core_type<tc>, window_params = [{transform_indices = @transform_0, window_bounds = array<i64: 56, 16>}, {transform_indices = @transform_1, window_bounds = array<i64: 56, 1>}, {pipeline_mode = #tpu.pipeline_mode<synchronous>, transform_indices = @transform_2, window_bounds = array<i64: 16, 8>}, {pipeline_mode = #tpu.pipeline_mode<synchronous>, transform_indices = @transform_3, window_bounds = array<i64: 4, 8>}, {pipeline_mode = #tpu.pipeline_mode<synchronous>, transform_indices = @transform_4, window_bounds = array<i64: 1, 8>}, {transform_indices = @transform_5, window_bounds = array<i64: 56, 8>}]} {
    %0 = tpu.iota {dimensions = array<i32: 1>} : vector<56x4xi32>
    %c0 = arith.constant 0 : index
    %c0_0 = arith.constant 0 : index
    %1 = vector.load %arg2[%c0, %c0_0] : memref<56x1xi32, #tpu.memory_space<vmem>>, vector<56x1xi32>
    %2 = vector.broadcast %1 : vector<56x1xi32> to vector<56x4xi32>
    %3 = arith.cmpi eq, %2, %0 : vector<56x4xi32>
    %4 = arith.extui %3 : vector<56x4xi1> to vector<56x4xi32>
    %5 = arith.sitofp %4 : vector<56x4xi32> to vector<56x4xf32>
    %c0_1 = arith.constant 0 : index
    %c0_2 = arith.constant 0 : index
    %6 = vector.load %arg1[%c0_1, %c0_2] : memref<56x16xf32, #tpu.memory_space<vmem>>, vector<56x16xf32>
    %c0_3 = arith.constant 0 : index
    %c0_4 = arith.constant 0 : index
    %7 = vector.load %arg3[%c0_3, %c0_4] : memref<16x8xf32, #tpu.memory_space<vmem>>, vector<16x8xf32>
    %cst = arith.constant dense<0.000000e+00> : vector<56x8xf32>
    %8 = tpu.matmul %6, %7, %cst {dimension_numbers = #tpu.dot_dimension_numbers<[1], [0], [0], [1], [0, 0, 1, 1], [], []>} : vector<56x16xf32>, vector<16x8xf32>, vector<56x8xf32> -> vector<56x8xf32>
    %c0_5 = arith.constant 0 : index
    %c0_6 = arith.constant 0 : index
    %9 = vector.load %arg4[%c0_5, %c0_6] : memref<4x8xf32, #tpu.memory_space<vmem>>, vector<4x8xf32>
    %cst_7 = arith.constant dense<0.000000e+00> : vector<56x8xf32>
    %10 = tpu.matmul %5, %9, %cst_7 {dimension_numbers = #tpu.dot_dimension_numbers<[1], [0], [0], [1], [0, 0, 1, 1], [], []>} : vector<56x4xf32>, vector<4x8xf32>, vector<56x8xf32> -> vector<56x8xf32>
    %11 = arith.addf %8, %10 : vector<56x8xf32>
    %c0_8 = arith.constant 0 : index
    %c0_9 = arith.constant 0 : index
    %12 = vector.load %arg5[%c0_8, %c0_9] : memref<1x8xf32, #tpu.memory_space<vmem>>, vector<1x8xf32>
    %13 = vector.broadcast %12 : vector<1x8xf32> to vector<56x8xf32>
    %14 = arith.addf %11, %13 : vector<56x8xf32>
    %c0_10 = arith.constant 0 : index
    %c0_11 = arith.constant 0 : index
    %15 = vector.load %arg6[%c0_10, %c0_11] : memref<56x8xf32, #tpu.memory_space<vmem>>, vector<56x8xf32>
    tpu.vector_store %arg6[%c0_10, %c0_11], %14 {strides = array<i32>} : memref<56x8xf32, #tpu.memory_space<vmem>>, vector<56x8xf32>,
    return
  }
  func.func @transform_0(%arg0: i32) -> (i32, i32) {
    %c0_i32 = arith.constant 0 : i32
    %c0_i32_0 = arith.constant 0 : i32
    return %arg0, %c0_i32 : i32, i32
  }
  func.func @transform_1(%arg0: i32) -> (i32, i32) {
    %c0_i32 = arith.constant 0 : i32
    %c0_i32_0 = arith.constant 0 : i32
    return %arg0, %c0_i32 : i32, i32
  }
  func.func @transform_2(%arg0: i32) -> (i32, i32) {
    %c0_i32 = arith.constant 0 : i32
    %c0_i32_0 = arith.constant 0 : i32
    %c0_i32_1 = arith.constant 0 : i32
    return %c0_i32, %c0_i32_0 : i32, i32
  }
  func.func @transform_3(%arg0: i32) -> (i32, i32) {
    %c0_i32 = arith.constant 0 : i32
    %c0_i32_0 = arith.constant 0 : i32
    %c0_i32_1 = arith.constant 0 : i32
    return %c0_i32, %c0_i32_0 : i32, i32
  }
  func.func @transform_4(%arg0: i32) -> (i32, i32) {
    %c0_i32 = arith.constant 0 : i32
    %c0_i32_0 = arith.constant 0 : i32
    %c0_i32_1 = arith.constant 0 : i32
    return %c0_i32, %c0_i32_0 : i32, i32
  }
  func.func @transform_5(%arg0: i32) -> (i32, i32) {
    %c0_i32 = arith.constant 0 : i32
    %c0_i32_0 = arith.constant 0 : i32
    return %arg0, %c0_i32 : i32, i32
  }
}

</mosaic_0001>

<llo_original>
// kernel: tpu_custom_call.1
$region0: #{tpu_custom_call.1}
  #allocation0 [shape = 'u32[]', space=smem, size = 0x4, offset = 0x4, fixed_abs, tag = 'smem constant byte address 0x4 - core index']
  #allocation1 [shape = 'u32[144,128]{1,0:T(1,128)}', space=vmem, size = 0x12000, scoped, tag = 'internal scratch']
  %s0 = inlined_call_operand.vmem [shape: f32[56,16], index: 0, kind: input, shape index: {}]
  %s1 = inlined_call_operand.vmem [shape: s32[56,1], index: 1, kind: input, shape index: {}]
  %s2 = inlined_call_operand.vmem [shape: f32[16,8], index: 2, kind: input, shape index: {}]
  %s3 = inlined_call_operand.vmem [shape: f32[4,8], index: 3, kind: input, shape index: {}]
  %s4 = inlined_call_operand.vmem [shape: f32[1,8], index: 4, kind: input, shape index: {}]
  %s5 = inlined_call_operand.vmem [shape: f32[56,8], index: 5, kind: output, shape index: {}]
  %s6 = sld [smem:[#allocation0]]
  $region30: #{tpu_custom_call.1} parent=0
    _
  %s8 = ssub.s32 1, %s6
  %s9 = scalar_select 0, %s8, %s6
  // Predicated region
  $region2: #{tpu_custom_call.1} parent=0 // pred_check
    _
  $region3: #{tpu_custom_call.1} parent=0 // pred_check_branch
    %11 = sbr.rel (0) target = $region5
  $region4: #{tpu_custom_call.1} parent=0 // pred_region
    _
  $region5: #{tpu_custom_call.1} parent=0 // pred_fallthru
    _
  // Predicated region
  $region6: #{tpu_custom_call.1} parent=0 // pred_check
    _
  $region7: #{tpu_custom_call.1} parent=0 // pred_check_branch
    %13 = sbr.rel (0) target = $region9
  $region8: #{tpu_custom_call.1} parent=0 // pred_region
    _
  $region9: #{tpu_custom_call.1} parent=0 // pred_fallthru
    _
  // Predicated region
  $region10: #{tpu_custom_call.1} parent=0 // pred_check
    _
  $region11: #{tpu_custom_call.1} parent=0 // pred_check_branch
    %15 = sbr.rel (0) target = $region13
  $region12: #{tpu_custom_call.1} parent=0 // pred_region
    _
  $region13: #{tpu_custom_call.1} parent=0 // pred_fallthru
    _
  // Predicated region
  $region14: #{tpu_custom_call.1} parent=0 // pred_check
    _
  $region15: #{tpu_custom_call.1} parent=0 // pred_check_branch
    %17 = sbr.rel (0) target = $region17
  $region16: #{tpu_custom_call.1} parent=0 // pred_region
    _
  $region17: #{tpu_custom_call.1} parent=0 // pred_fallthru
    _
  // Predicated region
  $region18: #{tpu_custom_call.1} parent=0 // pred_check
    _
  $region19: #{tpu_custom_call.1} parent=0 // pred_check_branch
    %19 = sbr.rel (0) target = $region21
  $region20: #{tpu_custom_call.1} parent=0 // pred_region
    _
  $region21: #{tpu_custom_call.1} parent=0 // pred_fallthru
    _
  %v20 = vlaneseq
  %v21 = vand.u32 %v20, 127
  %v22 = vld [vmem:[%s1] sm:$0xff]
  %v23 = vld [vmem:[%s1 + $0x8] sm:$0xff]
  %v24 = vld [vmem:[%s1 + $0x10] sm:$0xff]
  %v25 = vld [vmem:[%s1 + $0x18] sm:$0xff]
  %v26 = vld [vmem:[%s1 + $0x20] sm:$0xff]
  %v27 = vld [vmem:[%s1 + $0x28] sm:$0xff]
  %v28 = vld [vmem:[%s1 + $0x30] sm:$0xff]
  %29 = vset.pattern.permute.xlu0 0
  %30 = vperm.xlu0 %29, %v22
  %v31 = vpop.permute.xlu0 %30
  %32 = vset.pattern.permute.xlu0 0
  %33 = vperm.xlu0 %32, %v23
  %v34 = vpop.permute.xlu0 %33
  %35 = vset.pattern.permute.xlu0 0
  %36 = vperm.xlu0 %35, %v24
  %v37 = vpop.permute.xlu0 %36
  %38 = vset.pattern.permute.xlu0 0
  %39 = vperm.xlu0 %38, %v25
  %v40 = vpop.permute.xlu0 %39
  %41 = vset.pattern.permute.xlu0 0
  %42 = vperm.xlu0 %41, %v26
  %v43 = vpop.permute.xlu0 %42
  %44 = vset.pattern.permute.xlu0 0
  %45 = vperm.xlu0 %44, %v27
  %v46 = vpop.permute.xlu0 %45
  %47 = vset.pattern.permute.xlu0 0
  %48 = vperm.xlu0 %47, %v28
  %v49 = vpop.permute.xlu0 %48
  %vm50 = vcmp.eq.s32.totalorder %v31, %v21
  %vm51 = vcmp.eq.s32.totalorder %v34, %v21
  %vm52 = vcmp.eq.s32.totalorder %v37, %v21
  %vm53 = vcmp.eq.s32.totalorder %v40, %v21
  %vm54 = vcmp.eq.s32.totalorder %v43, %v21
  %vm55 = vcmp.eq.s32.totalorder %v46, %v21
  %vm56 = vcmp.eq.s32.totalorder %v49, %v21
  %v57 = vsel %vm50, 1, 0
  %v58 = vsel %vm51, 1, 0
  %v59 = vsel %vm52, 1, 0
  %v60 = vsel %vm53, 1, 0
  %v61 = vsel %vm54, 1, 0
  %v62 = vsel %vm55, 1, 0
  %v63 = vsel %vm56, 1, 0
  %v64 = vcvt.s32.f32 %v57
  %v65 = vcvt.s32.f32 %v58
  %v66 = vcvt.s32.f32 %v59
  %v67 = vcvt.s32.f32 %v60
  %v68 = vcvt.s32.f32 %v61
  %v69 = vcvt.s32.f32 %v62
  %v70 = vcvt.s32.f32 %v63
  %v71 = vld [vmem:[%s0] sm:$0xff]
  %v72 = vld [vmem:[%s0 + $0x8] sm:$0xff]
  %v73 = vld [vmem:[%s0 + $0x10] sm:$0xff]
  %v74 = vld [vmem:[%s0 + $0x18] sm:$0xff]
  %v75 = vld [vmem:[%s0 + $0x20] sm:$0xff]
  %v76 = vld [vmem:[%s0 + $0x28] sm:$0xff]
  %v77 = vld [vmem:[%s0 + $0x30] sm:$0xff]
  %v78 = vld [vmem:[%s2] sm:$0xff]
  %v79 = vld [vmem:[%s2 + $0x8] sm:$0xff]
  %v80 = vld [vmem:[%s3] sm:$0xf]
  %vm81 = vcmask 31744
  %v83 = vsel %vm81, %v64, 0
  %v86 = vsel %vm81, %v65, 0
  %v89 = vsel %vm81, %v66, 0
  %v92 = vsel %vm81, %v67, 0
  %v95 = vsel %vm81, %v68, 0
  %v98 = vsel %vm81, %v69, 0
  %v101 = vsel %vm81, %v70, 0
  %vm103 = vcmask 1043456
  %v105 = vsel %vm103, %v80, 0
  %107 = vmatprep.subr.mxu0 0.0
  %108 = vmatpush1.msra.mxu0 0.0
  %109 = vmatprep.subr.mxu0 0.0
  %110 = vmatpush1.msra.mxu0 0.0
  %111 = vmatprep.subr.mxu0 0.0
  %112 = vmatpush1.msra.mxu0 0.0
  %113 = vmatprep.subr.mxu0 0.0
  %114 = vmatpush1.msra.mxu0 0.0
  %115 = vmatprep.subr.mxu0 0.0
  %116 = vmatpush1.msra.mxu0 0.0
  %117 = vmatprep.subr.mxu0 0.0
  %118 = vmatpush1.msra.mxu0 0.0
  %119 = vmatprep.subr.mxu0 0.0
  %120 = vmatpush1.msra.mxu0 0.0
  %121 = vmatprep.subr.mxu0 0.0
  %122 = vmatpush1.msra.mxu0 0.0
  %123 = vmatprep.subr.mxu0 0.0
  %124 = vmatpush1.msra.mxu0 0.0
  %125 = vmatprep.subr.mxu0 0.0
  %126 = vmatpush1.msra.mxu0 0.0
  %127 = vmatprep.subr.mxu0 0.0
  %128 = vmatpush1.msra.mxu0 0.0
  %129 = vmatprep.subr.mxu0 0.0
  %130 = vmatpush1.msra.mxu0 0.0
  %131 = vmatprep.subr.mxu0 0.0
  %132 = vmatpush1.msra.mxu0 0.0
  %133 = vmatprep.subr.mxu0 0.0
  %134 = vmatpush1.msra.mxu0 0.0
  %135 = vmatprep.subr.mxu0 0.0
  %136 = vmatpush1.msra.mxu0 0.0
  %137 = vmatprep.subr.mxu0 0.0
  %138 = vmatpush1.msra.mxu0 %v105
  %139 = vmatprep.subr.mxu0 0.0
  %140 = vmatpush2.msra.mxu0 0.0
  %141 = vmatprep.subr.mxu0 0.0
  %142 = vmatpush2.msra.mxu0 0.0
  %143 = vmatprep.subr.mxu0 0.0
  %144 = vmatpush2.msra.mxu0 0.0
  %145 = vmatprep.subr.mxu0 0.0
  %146 = vmatpush2.msra.mxu0 0.0
  %147 = vmatprep.subr.mxu0 0.0
  %148 = vmatpush2.msra.mxu0 0.0
  %149 = vmatprep.subr.mxu0 0.0
  %150 = vmatpush2.msra.mxu0 0.0
  %151 = vmatprep.subr.mxu0 0.0
  %152 = vmatpush2.msra.mxu0 0.0
  %153 = vmatprep.subr.mxu0 0.0
  %154 = vmatpush2.msra.mxu0 0.0
  %155 = vmatprep.subr.mxu0 0.0
  %156 = vmatpush2.msra.mxu0 0.0
  %157 = vmatprep.subr.mxu0 0.0
  %158 = vmatpush2.msra.mxu0 0.0
  %159 = vmatprep.subr.mxu0 0.0
  %160 = vmatpush2.msra.mxu0 0.0
  %161 = vmatprep.subr.mxu0 0.0
  %162 = vmatpush2.msra.mxu0 0.0
  %163 = vmatprep.subr.mxu0 0.0
  %164 = vmatpush2.msra.mxu0 0.0
  %165 = vmatprep.subr.mxu0 0.0
  %166 = vmatpush2.msra.mxu0 0.0
  %167 = vmatprep.subr.mxu0 0.0
  %168 = vmatpush2.msra.mxu0 0.0
  %169 = vmatprep.subr.mxu0 0.0
  %170 = vmatpush2.msra.mxu0 0.0
  %171 = vmatprep.mubr.f32.mxu0 0.0
  %172 = vmatmul.mubr.f32.gmra.mxu0 %v83
  %v173 = vpop.f32.mrf.mxu0
  %v174 = vadd.f32 0.0, %v173
  %v175 = vpop.f32.mrf.mxu0
  %176 = vmatprep.mubr.f32.mxu0 0.0
  %177 = vmatmul.mubr.f32.gmra.mxu0 %v86
  %v178 = vpop.f32.mrf.mxu0
  %v179 = vadd.f32 0.0, %v178
  %v180 = vpop.f32.mrf.mxu0
  %181 = vmatprep.mubr.f32.mxu0 0.0
  %182 = vmatmul.mubr.f32.gmra.mxu0 %v89
  %v183 = vpop.f32.mrf.mxu0
  %v184 = vadd.f32 0.0, %v183
  %v185 = vpop.f32.mrf.mxu0
  %186 = vmatprep.mubr.f32.mxu0 0.0
  %187 = vmatmul.mubr.f32.gmra.mxu0 %v92
  %v188 = vpop.f32.mrf.mxu0
  %v189 = vadd.f32 0.0, %v188
  %v190 = vpop.f32.mrf.mxu0
  %191 = vmatprep.mubr.f32.mxu0 0.0
  %192 = vmatmul.mubr.f32.gmra.mxu0 %v95
  %v193 = vpop.f32.mrf.mxu0
  %v194 = vadd.f32 0.0, %v193
  %v195 = vpop.f32.mrf.mxu0
  %196 = vmatprep.mubr.f32.mxu0 0.0
  %197 = vmatmul.mubr.f32.gmra.mxu0 %v98
  %v198 = vpop.f32.mrf.mxu0
  %v199 = vadd.f32 0.0, %v198
  %v200 = vpop.f32.mrf.mxu0
  %201 = vmatprep.mubr.f32.mxu0 0.0
  %202 = vmatmul.mubr.f32.gmra.mxu0 %v101
  %v203 = vpop.f32.mrf.mxu0
  %v204 = vadd.f32 0.0, %v203
  %v205 = vpop.f32.mrf.mxu0
  %206 = vdwg.mxu0
  %vm207 = vcmask 130048
  %v209 = vsel %vm207, %v71, 0
  %v212 = vsel %vm207, %v72, 0
  %v215 = vsel %vm207, %v73, 0
  %v218 = vsel %vm207, %v74, 0
  %v221 = vsel %vm207, %v75, 0
  %v224 = vsel %vm207, %v76, 0
  %v227 = vsel %vm207, %v77, 0
  %229 = vmatprep.subr.mxu0 0.0
  %230 = vmatpush1.msra.mxu0 0.0
  %231 = vmatprep.subr.mxu0 0.0
  %232 = vmatpush1.msra.mxu0 0.0
  %233 = vmatprep.subr.mxu0 0.0
  %234 = vmatpush1.msra.mxu0 0.0
  %235 = vmatprep.subr.mxu0 0.0
  %236 = vmatpush1.msra.mxu0 0.0
  %237 = vmatprep.subr.mxu0 0.0
  %238 = vmatpush1.msra.mxu0 0.0
  %239 = vmatprep.subr.mxu0 0.0
  %240 = vmatpush1.msra.mxu0 0.0
  %241 = vmatprep.subr.mxu0 0.0
  %242 = vmatpush1.msra.mxu0 0.0
  %243 = vmatprep.subr.mxu0 0.0
  %244 = vmatpush1.msra.mxu0 0.0
  %245 = vmatprep.subr.mxu0 0.0
  %246 = vmatpush1.msra.mxu0 0.0
  %247 = vmatprep.subr.mxu0 0.0
  %248 = vmatpush1.msra.mxu0 0.0
  %249 = vmatprep.subr.mxu0 0.0
  %250 = vmatpush1.msra.mxu0 0.0
  %251 = vmatprep.subr.mxu0 0.0
  %252 = vmatpush1.msra.mxu0 0.0
  %253 = vmatprep.subr.mxu0 0.0
  %254 = vmatpush1.msra.mxu0 0.0
  %255 = vmatprep.subr.mxu0 0.0
  %256 = vmatpush1.msra.mxu0 0.0
  %257 = vmatprep.subr.mxu0 0.0
  %258 = vmatpush1.msra.mxu0 %v79
  %259 = vmatprep.subr.mxu0 0.0
  %260 = vmatpush1.msra.mxu0 %v78
  %261 = vmatprep.subr.mxu0 0.0
  %262 = vmatpush2.msra.mxu0 0.0
  %263 = vmatprep.subr.mxu0 0.0
  %264 = vmatpush2.msra.mxu0 0.0
  %265 = vmatprep.subr.mxu0 0.0
  %266 = vmatpush2.msra.mxu0 0.0
  %267 = vmatprep.subr.mxu0 0.0
  %268 = vmatpush2.msra.mxu0 0.0
  %269 = vmatprep.subr.mxu0 0.0
  %270 = vmatpush2.msra.mxu0 0.0
  %271 = vmatprep.subr.mxu0 0.0
  %272 = vmatpush2.msra.mxu0 0.0
  %273 = vmatprep.subr.mxu0 0.0
  %274 = vmatpush2.msra.mxu0 0.0
  %275 = vmatprep.subr.mxu0 0.0
  %276 = vmatpush2.msra.mxu0 0.0
  %277 = vmatprep.subr.mxu0 0.0
  %278 = vmatpush2.msra.mxu0 0.0
  %279 = vmatprep.subr.mxu0 0.0
  %280 = vmatpush2.msra.mxu0 0.0
  %281 = vmatprep.subr.mxu0 0.0
  %282 = vmatpush2.msra.mxu0 0.0
  %283 = vmatprep.subr.mxu0 0.0
  %284 = vmatpush2.msra.mxu0 0.0
  %285 = vmatprep.subr.mxu0 0.0
  %286 = vmatpush2.msra.mxu0 0.0
  %287 = vmatprep.subr.mxu0 0.0
  %288 = vmatpush2.msra.mxu0 0.0
  %289 = vmatprep.subr.mxu0 0.0
  %290 = vmatpush2.msra.mxu0 0.0
  %291 = vmatprep.subr.mxu0 0.0
  %292 = vmatpush2.msra.mxu0 0.0
  %293 = vmatprep.mubr.f32.mxu0 0.0
  %294 = vmatmul.mubr.f32.gmra.mxu0 %v209
  %v295 = vpop.f32.mrf.mxu0
  %v296 = vadd.f32 %v174, %v295
  %v297 = vpop.f32.mrf.mxu0
  %298 = vmatprep.mubr.f32.mxu0 0.0
  %299 = vmatmul.mubr.f32.gmra.mxu0 %v212
  %v300 = vpop.f32.mrf.mxu0
  %v301 = vadd.f32 %v179, %v300
  %v302 = vpop.f32.mrf.mxu0
  %303 = vmatprep.mubr.f32.mxu0 0.0
  %304 = vmatmul.mubr.f32.gmra.mxu0 %v215
  %v305 = vpop.f32.mrf.mxu0
  %v306 = vadd.f32 %v184, %v305
  %v307 = vpop.f32.mrf.mxu0
  %308 = vmatprep.mubr.f32.mxu0 0.0
  %309 = vmatmul.mubr.f32.gmra.mxu0 %v218
  %v310 = vpop.f32.mrf.mxu0
  %v311 = vadd.f32 %v189, %v310
  %v312 = vpop.f32.mrf.mxu0
  %313 = vmatprep.mubr.f32.mxu0 0.0
  %314 = vmatmul.mubr.f32.gmra.mxu0 %v221
  %v315 = vpop.f32.mrf.mxu0
  %v316 = vadd.f32 %v194, %v315
  %v317 = vpop.f32.mrf.mxu0
  %318 = vmatprep.mubr.f32.mxu0 0.0
  %319 = vmatmul.mubr.f32.gmra.mxu0 %v224
  %v320 = vpop.f32.mrf.mxu0
  %v321 = vadd.f32 %v199, %v320
  %v322 = vpop.f32.mrf.mxu0
  %323 = vmatprep.mubr.f32.mxu0 0.0
  %324 = vmatmul.mubr.f32.gmra.mxu0 %v227
  %v325 = vpop.f32.mrf.mxu0
  %v326 = vadd.f32 %v204, %v325
  %v327 = vpop.f32.mrf.mxu0
  %328 = vdwg.mxu0
  %v329 = vld [vmem:[%s4] sm:$0x1]
  %v331 = vlaneseq
  %v332 = vshrl.u32 %v331, 7
  %v333 = vsub.s32 0, %v332
  %v334 = vrot.slane %v329, %v333
  %v336 = vadd.f32 %v296, %v334
  %v337 = vadd.f32 %v301, %v334
  %v338 = vadd.f32 %v306, %v334
  %v339 = vadd.f32 %v311, %v334
  %v340 = vadd.f32 %v316, %v334
  %v341 = vadd.f32 %v321, %v334
  %v342 = vadd.f32 %v326, %v334
  %vm343 = vcmask 64512
  %344 = vst.msk [vmem:[%s5] sm:$0xff] %vm343, %v336
  %345 = vst.msk [vmem:[%s5 + $0x8] sm:$0xff] %vm343, %v337
  %346 = vst.msk [vmem:[%s5 + $0x10] sm:$0xff] %vm343, %v338
  %347 = vst.msk [vmem:[%s5 + $0x18] sm:$0xff] %vm343, %v339
  %348 = vst.msk [vmem:[%s5 + $0x20] sm:$0xff] %vm343, %v340
  %349 = vst.msk [vmem:[%s5 + $0x28] sm:$0xff] %vm343, %v341
  %350 = vst.msk [vmem:[%s5 + $0x30] sm:$0xff] %vm343, %v342
  // Predicated region
  $region22: #{tpu_custom_call.1} parent=0 // pred_check
    _
  $region23: #{tpu_custom_call.1} parent=0 // pred_check_branch
    %352 = sbr.rel (0) target = $region25
  $region24: #{tpu_custom_call.1} parent=0 // pred_region
    _
  $region25: #{tpu_custom_call.1} parent=0 // pred_fallthru
    _
  // Predicated region
  $region26: #{tpu_custom_call.1} parent=0 // pred_check
    _
  $region27: #{tpu_custom_call.1} parent=0 // pred_check_branch
    %354 = sbr.rel (0) target = $region29
  $region28: #{tpu_custom_call.1} parent=0 // pred_region
    _
  $region29: #{tpu_custom_call.1} parent=0 // pred_fallthru
    _

</llo_original>
